<compile_context>
chip_gen: v7x
topology: tpu7x:2x2x1
jax: 0.10.0
libtpu: 0.0.40
codegen_flags: <defaults>
</compile_context>

<pallas_src>
import numpy as np
import jax
import jax.numpy as jnp
from jax.experimental import pallas as pl
from jax.experimental.pallas import tpu as pltpu


def _cdiv(a, b):
    return -(-a // b)


def _pick_tiles(class_num, shots, out_dim, itemsize, target_tile_bytes=4 << 20):
    """Pick (classes_per_tile, out_dim_per_tile): lane-dense, ~4 MiB cache tiles."""
    # Lane tile: full out_dim if small, otherwise a multiple of 128.
    od_t = out_dim if out_dim <= 2048 else 2048
    row_bytes = max(1, shots * od_t * itemsize)
    tc = min(class_num, max(1, target_tile_bytes // row_bytes))
    if tc < class_num:
        # Multiple-of-8 class tile keeps the (tc*shots, od_t) blocks
        # sublane-aligned -> unmasked vst path.
        tc = min(class_num, max(8, (tc // 8) * 8))
    return int(tc), int(od_t)


def _lora_rep_kernel(a_rep_ref, cb_ref, cache_ref, out_ref):
    # rep[r, :] = (W_A[r // shots, :] @ W_C @ W_B)[:]  realized as one small
    # MXU matmul per tile (contraction dim = rank). MXU is idle in this
    # mem-bound kernel, so this is free and also performs the shots-broadcast.
    rep = jnp.dot(a_rep_ref[...].astype(jnp.float32),
                  cb_ref[...].astype(jnp.float32),
                  preferred_element_type=jnp.float32)        # (tc*shots, od_t) f32
    out_ref[...] = (cache_ref[...].astype(jnp.float32) + rep).astype(out_ref.dtype)


def lora_rep_forward(cache_keys, w_a, w_c, w_b, shots,
                     tile_classes=None, tile_out=None):
    """cache_keys: (class_num*shots, out_dim) or (class_num, shots, out_dim)."""
    class_num, rank = w_a.shape
    out_dim = w_b.shape[1]
    rows = class_num * shots
    cache2d = cache_keys.reshape(rows, out_dim)
    itemsize = cache2d.dtype.itemsize

    # Tiny factors prepared once in the wrapper (plain XLA, negligible cost).
    cb = jnp.dot(w_c.astype(jnp.float32), w_b.astype(jnp.float32),
                 preferred_element_type=jnp.float32)          # (rank, out_dim)
    a_rep = jnp.repeat(w_a.astype(jnp.float32), shots, axis=0)  # (rows, rank)

    tc, od_t = _pick_tiles(class_num, shots, out_dim, itemsize)
    if tile_classes is not None:
        tc = int(tile_classes)
    if tile_out is not None:
        od_t = int(tile_out)

    n_ct = _cdiv(class_num, tc)
    n_ot = _cdiv(out_dim, od_t)

    # Zero-pad the tiny factors to the full grid extents so ragged edge tiles
    # never push undefined VMEM through the MXU. cache/out stay unpadded:
    # Pallas masks their ragged edge loads/stores, and any garbage read there
    # stays local to rows/cols that are never stored (elementwise add only).
    a_rep = jnp.pad(a_rep, ((0, n_ct * tc * shots - rows), (0, 0)))
    cb = jnp.pad(cb, ((0, 0), (0, n_ot * od_t - out_dim)))

    # Explicit VMEM budget: double-buffered cache in + out + tiny factor tiles.
    tile_cache = tc * shots * od_t * itemsize
    tile_a = tc * shots * rank * 4
    tile_cb = rank * od_t * 4
    vmem_need = 2 * (2 * tile_cache + tile_a + tile_cb) + (2 << 20)
    vmem_limit = int(min(48 << 20, max(32 << 20, vmem_need)))

    out2d = pl.pallas_call(
        _lora_rep_kernel,
        out_shape=jax.ShapeDtypeStruct((rows, out_dim), cache2d.dtype),
        grid=(n_ct, n_ot),
        in_specs=[
            pl.BlockSpec((tc * shots, rank), lambda i, j: (i, 0)),   # A_rep tile
            pl.BlockSpec((rank, od_t), lambda i, j: (0, j)),         # CB tile
            pl.BlockSpec((tc * shots, od_t), lambda i, j: (i, j)),   # cache tile
        ],
        out_specs=pl.BlockSpec((tc * shots, od_t), lambda i, j: (i, j)),
        compiler_params=pltpu.CompilerParams(
            dimension_semantics=("parallel", "parallel"),
            vmem_limit_bytes=vmem_limit,
        ),
    )(a_rep, cb, cache2d)

    return out2d  # (class_num*shots, out_dim), same as the PyTorch forward


def init_params(key, class_num, rank, out_dim, dtype=jnp.float32):
    # matches nn.init.kaiming_uniform_(W_A, a=sqrt(5)); W_C = eye; W_B = zeros
    a = np.sqrt(5.0)
    gain = np.sqrt(2.0 / (1.0 + a * a))
    fan_in = rank
    bound = gain * np.sqrt(3.0 / fan_in)
    w_a = jax.random.uniform(key, (class_num, rank), dtype=dtype,
                             minval=-bound, maxval=bound)
    w_c = jnp.eye(rank, dtype=dtype)
    w_b = jnp.zeros((rank, out_dim), dtype=dtype)
    return w_a, w_c, w_b


def _reference(cache_keys, w_a, w_c, w_b, shots, out_dim):
    res = (w_a @ w_c) @ w_b
    return np.asarray(cache_keys.reshape(-1, out_dim) + jnp.repeat(res, shots, axis=0))


if __name__ == "__main__":
    key = jax.random.PRNGKey(0)
    k_a, k_b, k_cache, k_a2, k_b2, k_cache2 = jax.random.split(key, 6)

    # --- Case 1: small, nicely aligned shapes --------------------------------
    class_num, shots, out_dim, rank = 16, 4, 256, 32
    w_a, w_c, w_b = init_params(k_a, class_num, rank, out_dim)
    # give W_B a nonzero value so the LoRA path is actually exercised
    w_b = jax.random.normal(k_b, (rank, out_dim), dtype=jnp.float32) * 0.02
    cache_keys = jax.random.normal(k_cache, (class_num * shots, out_dim),
                                   dtype=jnp.float32)
    ref = _reference(cache_keys, w_a, w_c, w_b, shots, out_dim)

    # (a) auto-picked tiles (single block at this size)
    out_a = jax.block_until_ready(lora_rep_forward(cache_keys, w_a, w_c, w_b, shots))
    assert out_a.shape == (class_num * shots, out_dim)
    np.testing.assert_allclose(np.asarray(out_a), ref, rtol=1e-5, atol=1e-5)

    # (b) forced small tiles -> 2x2 grid: exercises the pipelined multi-tile path
    out_b = jax.block_until_ready(
        lora_rep_forward(cache_keys, w_a, w_c, w_b, shots,
                         tile_classes=8, tile_out=128))
    np.testing.assert_allclose(np.asarray(out_b), ref, rtol=1e-5, atol=1e-5)

    # --- Case 2: ragged shapes (block shapes don't divide) -------------------
    class_num2, shots2, out_dim2, rank2 = 10, 3, 200, 16
    w_a2, w_c2, w_b2 = init_params(k_a2, class_num2, rank2, out_dim2)
    w_b2 = jax.random.normal(k_b2, (rank2, out_dim2), dtype=jnp.float32) * 0.02
    cache_keys2 = jax.random.normal(k_cache2, (class_num2 * shots2, out_dim2),
                                    dtype=jnp.float32)
    ref2 = _reference(cache_keys2, w_a2, w_c2, w_b2, shots2, out_dim2)
    out_c = jax.block_until_ready(
        lora_rep_forward(cache_keys2, w_a2, w_c2, w_b2, shots2,
                         tile_classes=8, tile_out=128))
    np.testing.assert_allclose(np.asarray(out_c), ref2, rtol=1e-5, atol=1e-5)

    print("KERNEL_OK")
</pallas_src>

<mosaic_0001>
module attributes {stable_mosaic.version = 11 : i64} {
  func.func @_lora_rep_kernel(%arg0: i32, %arg1: i32, %arg2: memref<64x32xf32, #tpu.memory_space<vmem>>, %arg3: memref<32x256xf32, #tpu.memory_space<vmem>>, %arg4: memref<64x256xf32, #tpu.memory_space<vmem>>, %arg5: memref<64x256xf32, #tpu.memory_space<vmem>>) attributes {dimension_semantics = [#tpu.dimension_semantics<parallel>, #tpu.dimension_semantics<parallel>], iteration_bounds = array<i64: 1, 1>, scalar_prefetch = 0 : i64, scratch_operands = 0 : i64, tpu.core_type = #tpu.core_type<tc>, window_params = [{transform_indices = @transform_0, window_bounds = array<i64: 64, 32>}, {transform_indices = @transform_1, window_bounds = array<i64: 32, 256>}, {transform_indices = @transform_2, window_bounds = array<i64: 64, 256>}, {transform_indices = @transform_3, window_bounds = array<i64: 64, 256>}]} {
    %c0 = arith.constant 0 : index
    %c0_0 = arith.constant 0 : index
    %0 = vector.load %arg2[%c0, %c0_0] : memref<64x32xf32, #tpu.memory_space<vmem>>, vector<64x32xf32>
    %c0_1 = arith.constant 0 : index
    %c0_2 = arith.constant 0 : index
    %1 = vector.load %arg3[%c0_1, %c0_2] : memref<32x256xf32, #tpu.memory_space<vmem>>, vector<32x256xf32>
    %cst = arith.constant dense<0.000000e+00> : vector<64x256xf32>
    %2 = tpu.matmul %0, %1, %cst {dimension_numbers = #tpu.dot_dimension_numbers<[1], [0], [0], [1], [0, 0, 1, 1], [], []>} : vector<64x32xf32>, vector<32x256xf32>, vector<64x256xf32> -> vector<64x256xf32>
    %c0_3 = arith.constant 0 : index
    %c0_4 = arith.constant 0 : index
    %3 = vector.load %arg4[%c0_3, %c0_4] : memref<64x256xf32, #tpu.memory_space<vmem>>, vector<64x256xf32>
    %4 = arith.addf %3, %2 : vector<64x256xf32>
    %c0_5 = arith.constant 0 : index
    %c0_6 = arith.constant 0 : index
    %5 = vector.load %arg5[%c0_5, %c0_6] : memref<64x256xf32, #tpu.memory_space<vmem>>, vector<64x256xf32>
    tpu.vector_store %arg5[%c0_5, %c0_6], %4 {strides = array<i32>} : memref<64x256xf32, #tpu.memory_space<vmem>>, vector<64x256xf32>,
    return
  }
  func.func @transform_0(%arg0: i32, %arg1: i32) -> (i32, i32) {
    %c0_i32 = arith.constant 0 : i32
    %c0_i32_0 = arith.constant 0 : i32
    return %arg0, %c0_i32 : i32, i32
  }
  func.func @transform_1(%arg0: i32, %arg1: i32) -> (i32, i32) {
    %c0_i32 = arith.constant 0 : i32
    %c0_i32_0 = arith.constant 0 : i32
    return %c0_i32, %arg1 : i32, i32
  }
  func.func @transform_2(%arg0: i32, %arg1: i32) -> (i32, i32) {
    %c0_i32 = arith.constant 0 : i32
    return %arg0, %arg1 : i32, i32
  }
  func.func @transform_3(%arg0: i32, %arg1: i32) -> (i32, i32) {
    %c0_i32 = arith.constant 0 : i32
    return %arg0, %arg1 : i32, i32
  }
}

</mosaic_0001>

<llo_original>
// kernel: tpu_custom_call.1
$region0: #{tpu_custom_call.1}
  #allocation0 [shape = 'u32[]', space=smem, size = 0x4, offset = 0x4, fixed_abs, tag = 'smem constant byte address 0x4 - core index']
  #allocation1 [shape = 'u32[144,128]{1,0:T(1,128)}', space=vmem, size = 0x12000, scoped, tag = 'internal scratch']
  %s0 = inlined_call_operand.vmem [shape: f32[64,32], index: 0, kind: input, shape index: {}]
  %s1 = inlined_call_operand.vmem [shape: f32[32,256], index: 1, kind: input, shape index: {}]
  %s2 = inlined_call_operand.hbm [shape: f32[64,256], index: 2, kind: input, shape index: {}]
  %s3 = inlined_call_operand.hbm [shape: f32[64,256], index: 3, kind: output, shape index: {}]
  %s4 = sld [smem:[#allocation0]]
  $region26: #{tpu_custom_call.1} parent=0
    _
  %s6 = ssub.s32 1, %s4
  %s7 = scalar_select 0, %s6, %s4
  $region1: #{tpu_custom_call.1} parent=0
    #allocation2 [shape = 'u8[65536]{0}', space=vmem, size = 0x10000, scoped, tag = 'input window, operand 2, single buffered']
    #allocation3 [shape = 's32[1]{0}', space=sflag, size = 0x4, scoped, tag = 'scoped memory for tpu_custom_call.1']
    #allocation4 [shape = 's32[1]{0}', space=sflag, size = 0x4, scoped, tag = 'scoped memory for tpu_custom_call.1']
    #allocation5 [shape = 'u8[65536]{0}', space=vmem, size = 0x10000, scoped, tag = 'output window, operand 0, single buffered']
    %8 = vsyncpa [#allocation3], 0
    %9 = vsyncpa [#allocation4], 0
    // Predicated region
    $region2: #{tpu_custom_call.1} parent=1 // pred_check
      _
    $region3: #{tpu_custom_call.1} parent=1 // pred_check_branch
      %11 = sbr.rel (0) target = $region5
    $region4: #{tpu_custom_call.1} parent=1 // pred_region
      _
    $region5: #{tpu_custom_call.1} parent=1 // pred_fallthru
      _
    // Predicated region
    $region6: #{tpu_custom_call.1} parent=1 // pred_check
      _
    $region7: #{tpu_custom_call.1} parent=1 // pred_check_branch
      %13 = sbr.rel (0) target = $region9
    $region8: #{tpu_custom_call.1} parent=1 // pred_region
      _
    $region9: #{tpu_custom_call.1} parent=1 // pred_fallthru
      _
    // Predicated region
    $region10: #{tpu_custom_call.1} parent=1 // pred_check
      _
    $region11: #{tpu_custom_call.1} parent=1 // pred_check_branch
      %15 = sbr.rel (0) target = $region13
    $region12: #{tpu_custom_call.1} parent=1 // pred_region
      %s17 = ssub.s32 2048, 2048
      %18 = vsyncadd [#allocation3], %s17
      %s19 = sshll.u32 [#allocation2], 4
      %s20 = int_to_ptr.vmem [resolvable:$true] %s19
      %25 = dma.hbm_to_vmem [thread:$0]  %s2, 2048, %s20, [#allocation3], 256, 256, 16
    $region13: #{tpu_custom_call.1} parent=1 // pred_fallthru
      _
    // Predicated region
    $region14: #{tpu_custom_call.1} parent=1 // pred_check
      _
    $region15: #{tpu_custom_call.1} parent=1 // pred_check_branch
      %27 = sbr.rel (0) target = $region17
    $region16: #{tpu_custom_call.1} parent=1 // pred_region
      %28 = dma.done [#allocation3], 2048
    $region17: #{tpu_custom_call.1} parent=1 // pred_fallthru
      _
    %v29 = vld [vmem:[%s0] sm:$0xff]
    %v30 = vld [vmem:[%s0 + $0x8] sm:$0xff]
    %v31 = vld [vmem:[%s0 + $0x10] sm:$0xff]
    %v32 = vld [vmem:[%s0 + $0x18] sm:$0xff]
    %v33 = vld [vmem:[%s0 + $0x20] sm:$0xff]
    %v34 = vld [vmem:[%s0 + $0x28] sm:$0xff]
    %v35 = vld [vmem:[%s0 + $0x30] sm:$0xff]
    %v36 = vld [vmem:[%s0 + $0x38] sm:$0xff]
    %v37 = vld [vmem:[%s1] sm:$0xff]
    %v38 = vld [vmem:[%s1 + $0x8] sm:$0xff]
    %v39 = vld [vmem:[%s1 + $0x10] sm:$0xff]
    %v40 = vld [vmem:[%s1 + $0x18] sm:$0xff]
    %v41 = vld [vmem:[%s1 + $0x20] sm:$0xff]
    %v42 = vld [vmem:[%s1 + $0x28] sm:$0xff]
    %v43 = vld [vmem:[%s1 + $0x30] sm:$0xff]
    %v44 = vld [vmem:[%s1 + $0x38] sm:$0xff]
    %vm45 = vcmask 261120
    %v47 = vsel %vm45, %v29, 0
    %v50 = vsel %vm45, %v30, 0
    %v53 = vsel %vm45, %v31, 0
    %v56 = vsel %vm45, %v32, 0
    %v59 = vsel %vm45, %v33, 0
    %v62 = vsel %vm45, %v34, 0
    %v65 = vsel %vm45, %v35, 0
    %v68 = vsel %vm45, %v36, 0
    %70 = vmatprep.subr.mxu0 %v38
    %71 = vmatpush1.msra.mxu0 %v37
    %72 = vmatprep.subr.mxu0 %v40
    %73 = vmatpush1.msra.mxu0 %v39
    %74 = vmatprep.subr.mxu0 %v42
    %75 = vmatpush1.msra.mxu0 %v41
    %76 = vmatprep.subr.mxu0 %v44
    %77 = vmatpush1.msra.mxu0 %v43
    %78 = vmatprep.subr.mxu0 0.0
    %79 = vmatpush1.msra.mxu0 0.0
    %80 = vmatprep.subr.mxu0 0.0
    %81 = vmatpush1.msra.mxu0 0.0
    %82 = vmatprep.subr.mxu0 0.0
    %83 = vmatpush1.msra.mxu0 0.0
    %84 = vmatprep.subr.mxu0 0.0
    %85 = vmatpush1.msra.mxu0 0.0
    %86 = vmatprep.subr.mxu0 0.0
    %87 = vmatpush1.msra.mxu0 0.0
    %88 = vmatprep.subr.mxu0 0.0
    %89 = vmatpush1.msra.mxu0 0.0
    %90 = vmatprep.subr.mxu0 0.0
    %91 = vmatpush1.msra.mxu0 0.0
    %92 = vmatprep.subr.mxu0 0.0
    %93 = vmatpush1.msra.mxu0 0.0
    %94 = vmatprep.subr.mxu0 0.0
    %95 = vmatpush1.msra.mxu0 0.0
    %96 = vmatprep.subr.mxu0 0.0
    %97 = vmatpush1.msra.mxu0 0.0
    %98 = vmatprep.subr.mxu0 0.0
    %99 = vmatpush1.msra.mxu0 0.0
    %100 = vmatprep.subr.mxu0 0.0
    %101 = vmatpush1.msra.mxu0 0.0
    %102 = vmatprep.subr.mxu0 0.0
    %103 = vmatpush1.msra.mxu0 0.0
    %104 = vmatprep.subr.mxu0 0.0
    %105 = vmatpush1.msra.mxu0 0.0
    %106 = vmatprep.subr.mxu0 0.0
    %107 = vmatpush1.msra.mxu0 0.0
    %108 = vmatprep.subr.mxu0 0.0
    %109 = vmatpush1.msra.mxu0 0.0
    %110 = vmatprep.subr.mxu0 0.0
    %111 = vmatpush1.msra.mxu0 0.0
    %112 = vmatprep.subr.mxu0 0.0
    %113 = vmatpush1.msra.mxu0 0.0
    %114 = vmatprep.subr.mxu0 0.0
    %115 = vmatpush1.msra.mxu0 0.0
    %116 = vmatprep.subr.mxu0 0.0
    %117 = vmatpush1.msra.mxu0 0.0
    %118 = vmatprep.subr.mxu0 0.0
    %119 = vmatpush1.msra.mxu0 0.0
    %120 = vmatprep.subr.mxu0 0.0
    %121 = vmatpush1.msra.mxu0 0.0
    %122 = vmatprep.subr.mxu0 0.0
    %123 = vmatpush1.msra.mxu0 0.0
    %124 = vmatprep.subr.mxu0 0.0
    %125 = vmatpush1.msra.mxu0 0.0
    %126 = vmatprep.subr.mxu0 0.0
    %127 = vmatpush1.msra.mxu0 0.0
    %128 = vmatprep.subr.mxu0 0.0
    %129 = vmatpush1.msra.mxu0 0.0
    %130 = vmatprep.subr.mxu0 0.0
    %131 = vmatpush1.msra.mxu0 0.0
    %132 = vmatprep.subr.mxu0 0.0
    %133 = vmatpush1.msra.mxu0 0.0
    %134 = vmatprep.mubr.f32.mxu0 0.0
    %135 = vmatmul.mubr.f32.gmra.mrb[0].mxu0 %v47
    %v136 = vpop.f32.mrb[0].mxu0
    %v137 = vadd.f32 0.0, %v136
    %v138 = vpop.f32.mrb[0].mxu0
    %v139 = vadd.f32 0.0, %v138
    %140 = vmatprep.mubr.f32.mxu0 0.0
    %141 = vmatmul.mubr.f32.gmra.mrb[0].mxu0 %v50
    %v142 = vpop.f32.mrb[0].mxu0
    %v143 = vadd.f32 0.0, %v142
    %v144 = vpop.f32.mrb[0].mxu0
    %v145 = vadd.f32 0.0, %v144
    %146 = vmatprep.mubr.f32.mxu0 0.0
    %147 = vmatmul.mubr.f32.gmra.mrb[0].mxu0 %v53
    %v148 = vpop.f32.mrb[0].mxu0
    %v149 = vadd.f32 0.0, %v148
    %v150 = vpop.f32.mrb[0].mxu0
    %v151 = vadd.f32 0.0, %v150
    %152 = vmatprep.mubr.f32.mxu0 0.0
    %153 = vmatmul.mubr.f32.gmra.mrb[0].mxu0 %v56
    %v154 = vpop.f32.mrb[0].mxu0
    %v155 = vadd.f32 0.0, %v154
    %v156 = vpop.f32.mrb[0].mxu0
    %v157 = vadd.f32 0.0, %v156
    %158 = vmatprep.mubr.f32.mxu0 0.0
    %159 = vmatmul.mubr.f32.gmra.mrb[0].mxu0 %v59
    %v160 = vpop.f32.mrb[0].mxu0
    %v161 = vadd.f32 0.0, %v160
    %v162 = vpop.f32.mrb[0].mxu0
    %v163 = vadd.f32 0.0, %v162
    %164 = vmatprep.mubr.f32.mxu0 0.0
    %165 = vmatmul.mubr.f32.gmra.mrb[0].mxu0 %v62
    %v166 = vpop.f32.mrb[0].mxu0
    %v167 = vadd.f32 0.0, %v166
    %v168 = vpop.f32.mrb[0].mxu0
    %v169 = vadd.f32 0.0, %v168
    %170 = vmatprep.mubr.f32.mxu0 0.0
    %171 = vmatmul.mubr.f32.gmra.mrb[0].mxu0 %v65
    %v172 = vpop.f32.mrb[0].mxu0
    %v173 = vadd.f32 0.0, %v172
    %v174 = vpop.f32.mrb[0].mxu0
    %v175 = vadd.f32 0.0, %v174
    %176 = vmatprep.mubr.f32.mxu0 0.0
    %177 = vmatmul.mubr.f32.gmra.mrb[0].mxu0 %v68
    %v178 = vpop.f32.mrb[0].mxu0
    %v179 = vadd.f32 0.0, %v178
    %v180 = vpop.f32.mrb[0].mxu0
    %v181 = vadd.f32 0.0, %v180
    %182 = vdwg.mxu0
    %v183 = vld [vmem:[#allocation2] sm:$0xff]
    %v184 = vld [vmem:[#allocation2 + $0x8] sm:$0xff]
    %v185 = vld [vmem:[#allocation2 + $0x10] sm:$0xff]
    %v186 = vld [vmem:[#allocation2 + $0x18] sm:$0xff]
    %v187 = vld [vmem:[#allocation2 + $0x20] sm:$0xff]
    %v188 = vld [vmem:[#allocation2 + $0x28] sm:$0xff]
    %v189 = vld [vmem:[#allocation2 + $0x30] sm:$0xff]
    %v190 = vld [vmem:[#allocation2 + $0x38] sm:$0xff]
    %v191 = vld [vmem:[#allocation2 + $0x40] sm:$0xff]
    %v192 = vld [vmem:[#allocation2 + $0x48] sm:$0xff]
    %v193 = vld [vmem:[#allocation2 + $0x50] sm:$0xff]
    %v194 = vld [vmem:[#allocation2 + $0x58] sm:$0xff]
    %v195 = vld [vmem:[#allocation2 + $0x60] sm:$0xff]
    %v196 = vld [vmem:[#allocation2 + $0x68] sm:$0xff]
    %v197 = vld [vmem:[#allocation2 + $0x70] sm:$0xff]
    %v198 = vld [vmem:[#allocation2 + $0x78] sm:$0xff]
    %v199 = vadd.f32 %v183, %v137
    %v200 = vadd.f32 %v184, %v139
    %v201 = vadd.f32 %v185, %v143
    %v202 = vadd.f32 %v186, %v145
    %v203 = vadd.f32 %v187, %v149
    %v204 = vadd.f32 %v188, %v151
    %v205 = vadd.f32 %v189, %v155
    %v206 = vadd.f32 %v190, %v157
    %v207 = vadd.f32 %v191, %v161
    %v208 = vadd.f32 %v192, %v163
    %v209 = vadd.f32 %v193, %v167
    %v210 = vadd.f32 %v194, %v169
    %v211 = vadd.f32 %v195, %v173
    %v212 = vadd.f32 %v196, %v175
    %v213 = vadd.f32 %v197, %v179
    %v214 = vadd.f32 %v198, %v181
    %215 = vst [vmem:[#allocation5] sm:$0xff] %v199
    %216 = vst [vmem:[#allocation5 + $0x8] sm:$0xff] %v200
    %217 = vst [vmem:[#allocation5 + $0x10] sm:$0xff] %v201
    %218 = vst [vmem:[#allocation5 + $0x18] sm:$0xff] %v202
    %219 = vst [vmem:[#allocation5 + $0x20] sm:$0xff] %v203
    %220 = vst [vmem:[#allocation5 + $0x28] sm:$0xff] %v204
    %221 = vst [vmem:[#allocation5 + $0x30] sm:$0xff] %v205
    %222 = vst [vmem:[#allocation5 + $0x38] sm:$0xff] %v206
    %223 = vst [vmem:[#allocation5 + $0x40] sm:$0xff] %v207
    %224 = vst [vmem:[#allocation5 + $0x48] sm:$0xff] %v208
    %225 = vst [vmem:[#allocation5 + $0x50] sm:$0xff] %v209
    %226 = vst [vmem:[#allocation5 + $0x58] sm:$0xff] %v210
    %227 = vst [vmem:[#allocation5 + $0x60] sm:$0xff] %v211
    %228 = vst [vmem:[#allocation5 + $0x68] sm:$0xff] %v212
    %229 = vst [vmem:[#allocation5 + $0x70] sm:$0xff] %v213
    %230 = vst [vmem:[#allocation5 + $0x78] sm:$0xff] %v214
    // Predicated region
    $region18: #{tpu_custom_call.1} parent=1 // pred_check
      _
    $region19: #{tpu_custom_call.1} parent=1 // pred_check_branch
      %232 = sbr.rel (0) target = $region21
    $region20: #{tpu_custom_call.1} parent=1 // pred_region
      %s234 = ssub.s32 2048, 2048
      %235 = vsyncadd [#allocation4], %s234
      %s236 = sshll.u32 [#allocation5], 4
      %s237 = int_to_ptr.vmem [resolvable:$true] %s236
      %242 = dma.vmem_to_hbm [thread:$0]  %s237, 2048, %s3, [#allocation4], 256, 256, 16
    $region21: #{tpu_custom_call.1} parent=1 // pred_fallthru
      _
    // Predicated region
    $region22: #{tpu_custom_call.1} parent=1 // pred_check
      _
    $region23: #{tpu_custom_call.1} parent=1 // pred_check_branch
      %244 = sbr.rel (0) target = $region25
    $region24: #{tpu_custom_call.1} parent=1 // pred_region
      %245 = dma.done [#allocation4], 2048
    $region25: #{tpu_custom_call.1} parent=1 // pred_fallthru
      _
    %246 = vsyncpa [#allocation3], 1
    %247 = vsyncpa [#allocation4], 1

</llo_original>
